<compile_context>
chip_gen: v6e
topology: v6e:2x2x1
jax: 0.10.0
libtpu: 0.0.40
codegen_flags: <defaults>
</compile_context>

<pallas_src>
import functools

import numpy as np
import jax
import jax.numpy as jnp
from jax.experimental import pallas as pl
from jax.experimental.pallas import tpu as pltpu

_EPS = 1e-5                              # nn.BatchNorm2d default eps
_M_TILE_MAX = 1024                       # patch-row tile upper bound (mult of 16)
_VMEM_BUDGET_BYTES = 28 * 1024 * 1024    # per-layer tile footprint target
_VMEM_LIMIT_BYTES = 48 * 1024 * 1024     # scoped VMEM limit (fits v7x 64 MiB)


def _round_up(x, m):
    return (x + m - 1) // m * m


# ----------------------------------------------------------------------------
# Pallas kernels
# ----------------------------------------------------------------------------
def _relu_stats_finalize(acc, bias, y_ref, s_ref, ss_ref, m, m_valid, m_tile):
    """bias + ReLU (f32), write bf16 y and masked per-tile sum / sumsq (f32)."""
    y = jnp.maximum(acc + bias, 0.0)
    y_ref[...] = y.astype(y_ref.dtype)
    row = jax.lax.broadcasted_iota(jnp.int32, (m_tile, 1), 0) + m * m_tile
    ym = jnp.where(row < m_valid, y, 0.0)             # mask padded rows
    s_ref[...] = jnp.broadcast_to(jnp.sum(ym, axis=0, keepdims=True), s_ref.shape)
    ss_ref[...] = jnp.broadcast_to(jnp.sum(ym * ym, axis=0, keepdims=True),
                                   ss_ref.shape)


def _conv_relu_stats_k1_kernel(x_ref, w_ref, b_ref, y_ref, s_ref, ss_ref, *,
                               m_valid, m_tile):
    """Whole-K-resident conv tile: y = relu(x @ w + b) plus BN partial stats."""
    m = pl.program_id(0)    # program_id only at top level (interpret-safe)
    acc = jnp.dot(x_ref[...], w_ref[...], preferred_element_type=jnp.float32)
    _relu_stats_finalize(acc, b_ref[...], y_ref, s_ref, ss_ref, m, m_valid, m_tile)


def _conv_relu_stats_kernel(x_ref, w_ref, b_ref, y_ref, s_ref, ss_ref, acc_ref,
                            *, m_valid, m_tile, nk):
    """K-tiled fallback: accumulate in f32 VMEM, finalize on the last K step."""
    m = pl.program_id(0)
    k = pl.program_id(1)

    @pl.when(k == 0)
    def _init():
        acc_ref[...] = jnp.zeros_like(acc_ref)

    acc_ref[...] += jnp.dot(x_ref[...], w_ref[...],
                            preferred_element_type=jnp.float32)

    @pl.when(k == nk - 1)
    def _finalize():
        _relu_stats_finalize(acc_ref[...], b_ref[...], y_ref, s_ref, ss_ref,
                             m, m_valid, m_tile)


def _matmul_bias_k1_kernel(x_ref, w_ref, b_ref, o_ref):
    o_ref[...] = (jnp.dot(x_ref[...], w_ref[...],
                          preferred_element_type=jnp.float32)
                  + b_ref[...]).astype(o_ref.dtype)


def _matmul_bias_kernel(x_ref, w_ref, b_ref, o_ref, acc_ref, *, nk):
    k = pl.program_id(1)

    @pl.when(k == 0)
    def _init():
        acc_ref[...] = jnp.zeros_like(acc_ref)

    acc_ref[...] += jnp.dot(x_ref[...], w_ref[...],
                            preferred_element_type=jnp.float32)

    @pl.when(k == nk - 1)
    def _finalize():
        o_ref[...] = (acc_ref[...] + b_ref[...]).astype(o_ref.dtype)


# ----------------------------------------------------------------------------
# Tiling / pallas_call wrappers
# ----------------------------------------------------------------------------
def _tiling(M, Kp, Cp, out_bytes, need_stats):
    Mp = _round_up(max(M, 16), 16)

    def footprint(mt, kt, nk):
        f = 2 * mt * kt * 2              # double-buffered bf16 x tile
        f += 2 * kt * Cp * 2             # double-buffered bf16 weight tile
        f += 2 * mt * Cp * out_bytes     # double-buffered output tile
        if nk > 1:
            f += mt * Cp * 4             # f32 accumulator scratch
        if need_stats:
            f += 2 * 2 * 8 * Cp * 4      # sum / sumsq tiles
        return f

    # Prefer a fully K-resident weight (nk == 1); shrink the M tile first.
    m_tile = min(_M_TILE_MAX, Mp)
    while m_tile > 128 and footprint(m_tile, Kp, 1) > _VMEM_BUDGET_BYTES:
        m_tile = max(128, _round_up(m_tile // 2, 16))
    Mp = _round_up(Mp, m_tile)
    if Mp // m_tile == 1 and Mp % 32 == 0:
        m_tile = Mp // 2                 # >=2 "parallel" blocks for v7x megacore

    if footprint(m_tile, Kp, 1) <= _VMEM_BUDGET_BYTES:
        k_tile = Kp
    else:
        k_tile = 128                     # Kp is always a multiple of 128
        t = 256
        while t < Kp:
            if Kp % t == 0 and footprint(m_tile, t, Kp // t) <= _VMEM_BUDGET_BYTES:
                k_tile = t
            t += 128
    return Mp, m_tile, Mp // m_tile, k_tile, Kp // k_tile


def _conv_relu_bn_matmul(patches, wmat, bias, gamma, beta, out_dtype):
    """relu(patches @ wmat + bias) -> train-mode BatchNorm (affine in jnp)."""
    M, K = patches.shape
    Kp, Cp = wmat.shape
    C = bias.shape[1]
    Mp, m_tile, nm, k_tile, nk = _tiling(M, Kp, Cp, out_bytes=2, need_stats=True)

    xp = jnp.pad(patches, ((0, Mp - M), (0, Kp - K)))
    bp = jnp.pad(bias, ((0, 0), (0, Cp - C)))

    out_shape = (jax.ShapeDtypeStruct((Mp, Cp), jnp.bfloat16),    # bf16 activations
                 jax.ShapeDtypeStruct((nm * 8, Cp), jnp.float32),  # per-tile sum
                 jax.ShapeDtypeStruct((nm * 8, Cp), jnp.float32))  # per-tile sumsq

    if nk == 1:
        kern = functools.partial(_conv_relu_stats_k1_kernel,
                                 m_valid=M, m_tile=m_tile)
        grid_spec = pltpu.PrefetchScalarGridSpec(
            num_scalar_prefetch=0, grid=(nm,),
            in_specs=[
                pl.BlockSpec((m_tile, Kp), lambda m: (m, 0)),
                pl.BlockSpec((Kp, Cp), lambda m: (0, 0)),     # weight resident
                pl.BlockSpec((1, Cp), lambda m: (0, 0)),
            ],
            out_specs=(
                pl.BlockSpec((m_tile, Cp), lambda m: (m, 0)),
                pl.BlockSpec((8, Cp), lambda m: (m, 0)),
                pl.BlockSpec((8, Cp), lambda m: (m, 0)),
            ))
        semantics = ("parallel",)
    else:
        kern = functools.partial(_conv_relu_stats_kernel,
                                 m_valid=M, m_tile=m_tile, nk=nk)
        grid_spec = pltpu.PrefetchScalarGridSpec(
            num_scalar_prefetch=0, grid=(nm, nk),
            in_specs=[
                pl.BlockSpec((m_tile, k_tile), lambda m, k: (m, k)),
                pl.BlockSpec((k_tile, Cp), lambda m, k: (k, 0)),
                pl.BlockSpec((1, Cp), lambda m, k: (0, 0)),
            ],
            out_specs=(
                pl.BlockSpec((m_tile, Cp), lambda m, k: (m, 0)),
                pl.BlockSpec((8, Cp), lambda m, k: (m, 0)),
                pl.BlockSpec((8, Cp), lambda m, k: (m, 0)),
            ),
            scratch_shapes=[pltpu.VMEM((m_tile, Cp), jnp.float32)])
        semantics = ("parallel", "arbitrary")

    y, s, ss = pl.pallas_call(
        kern, out_shape=out_shape, grid_spec=grid_spec,
        compiler_params=pltpu.CompilerParams(
            dimension_semantics=semantics,
            vmem_limit_bytes=_VMEM_LIMIT_BYTES),
    )(xp, wmat, bp)

    # BatchNorm finalize (training-mode batch statistics) from f32 partials.
    inv_n = 1.0 / float(M)
    mean = jnp.sum(s.reshape(nm, 8, Cp)[:, 0, :C], axis=0) * inv_n
    var = jnp.sum(ss.reshape(nm, 8, Cp)[:, 0, :C], axis=0) * inv_n - mean * mean
    var = jnp.maximum(var, 0.0)
    scale = gamma[0] * jax.lax.rsqrt(var + _EPS)        # (C,)
    shift = beta[0] - mean * scale                      # (C,)
    # Per-channel affine in plain jnp: XLA fuses it into the next layer's
    # im2col slice / pad / bf16 cast (no extra Pallas pass / HBM round trip).
    yf = y[:M, :C].astype(jnp.float32)
    return (yf * scale + shift).astype(out_dtype)


def _matmul_bias(patches, wmat, bias, out_dtype=jnp.bfloat16):
    M, K = patches.shape
    Kp, Cp = wmat.shape
    C = bias.shape[1]
    Mp, m_tile, nm, k_tile, nk = _tiling(M, Kp, Cp, out_bytes=2, need_stats=False)

    xp = jnp.pad(patches, ((0, Mp - M), (0, Kp - K)))
    bp = jnp.pad(bias, ((0, 0), (0, Cp - C)))
    out_shape = jax.ShapeDtypeStruct((Mp, Cp), out_dtype)

    if nk == 1:
        kern = _matmul_bias_k1_kernel
        grid_spec = pltpu.PrefetchScalarGridSpec(
            num_scalar_prefetch=0, grid=(nm,),
            in_specs=[
                pl.BlockSpec((m_tile, Kp), lambda m: (m, 0)),
                pl.BlockSpec((Kp, Cp), lambda m: (0, 0)),
                pl.BlockSpec((1, Cp), lambda m: (0, 0)),
            ],
            out_specs=pl.BlockSpec((m_tile, Cp), lambda m: (m, 0)))
        semantics = ("parallel",)
    else:
        kern = functools.partial(_matmul_bias_kernel, nk=nk)
        grid_spec = pltpu.PrefetchScalarGridSpec(
            num_scalar_prefetch=0, grid=(nm, nk),
            in_specs=[
                pl.BlockSpec((m_tile, k_tile), lambda m, k: (m, k)),
                pl.BlockSpec((k_tile, Cp), lambda m, k: (k, 0)),
                pl.BlockSpec((1, Cp), lambda m, k: (0, 0)),
            ],
            out_specs=pl.BlockSpec((m_tile, Cp), lambda m, k: (m, 0)),
            scratch_shapes=[pltpu.VMEM((m_tile, Cp), jnp.float32)])
        semantics = ("parallel", "arbitrary")

    out = pl.pallas_call(
        kern, out_shape=out_shape, grid_spec=grid_spec,
        compiler_params=pltpu.CompilerParams(
            dimension_semantics=semantics,
            vmem_limit_bytes=_VMEM_LIMIT_BYTES),
    )(xp, wmat, bp)
    return out[:M, :C]


# ----------------------------------------------------------------------------
# Layer glue (im2col / sub-pixel transpose) — plain JAX, bf16 patches
# ----------------------------------------------------------------------------
def conv3x3_relu_bn(x, layer, stride=1, out_dtype=jnp.bfloat16):
    """Conv2d(k=3, pad=1, stride) + ReLU + BatchNorm2d (train-mode batch stats)."""
    N, H, W, Cin = x.shape
    Ho = (H + 2 - 3) // stride + 1
    Wo = (W + 2 - 3) // stride + 1
    xp = jnp.pad(x.astype(jnp.bfloat16), ((0, 0), (1, 1), (1, 1), (0, 0)))
    # TODO(synk): replace the HBM-materialized im2col with in-kernel halo tiling
    # (9 shift-and-accumulate matmuls over a (tile_h+2, W+2, Cin) VMEM slab) to
    # cut the remaining 9x bf16 patch traffic.
    cols = [xp[:, kh:kh + (Ho - 1) * stride + 1:stride,
               kw:kw + (Wo - 1) * stride + 1:stride, :]
            for kh in range(3) for kw in range(3)]
    patches = jnp.concatenate(cols, axis=-1).reshape(N * Ho * Wo, 9 * Cin)
    out = _conv_relu_bn_matmul(patches, layer['w'], layer['b'],
                               layer['g'], layer['bt'], out_dtype)
    return out.reshape(N, Ho, Wo, -1)


def convtranspose3x3_s2(x, layer):
    """ConvTranspose2d(k=3, stride=2, padding=1, output_padding=1) -> (2H, 2W).
    Sub-pixel decomposition: one matmul against a (4*Cin, 4*Cout) phase matrix."""
    N, H, W, Cin = x.shape
    Cout = layer['b'].shape[1] // 4
    xp = jnp.pad(x.astype(jnp.bfloat16), ((0, 0), (0, 1), (0, 1), (0, 0)))
    cols = [xp[:, dy:dy + H, dx:dx + W, :] for dy in (0, 1) for dx in (0, 1)]
    patches = jnp.concatenate(cols, axis=-1).reshape(N * H * W, 4 * Cin)
    out = _matmul_bias(patches, layer['w'], layer['b'])          # (M, 4*Cout) bf16
    out = out.reshape(N, H, W, 2, 2, Cout)                       # (n,a,b,ry,rx,c)
    out = out.transpose(0, 1, 3, 2, 4, 5).reshape(N, 2 * H, 2 * W, Cout)
    return out


# ----------------------------------------------------------------------------
# Blocks (mirror the nn.Sequential compositions)
# ----------------------------------------------------------------------------
def conv_encode(x, p):
    x = conv3x3_relu_bn(x, p['c1'])
    return conv3x3_relu_bn(x, p['c2'])


def conv_downsample(x, p):
    x = conv3x3_relu_bn(x, p['c1'], stride=2)
    return conv3x3_relu_bn(x, p['c2'])


def conv_decode(x, p):
    x = conv3x3_relu_bn(x, p['c1'])
    x = conv3x3_relu_bn(x, p['c2'])
    return convtranspose3x3_s2(x, p['ct'])


def final_block(x, p):
    x = conv3x3_relu_bn(x, p['c1'])
    x = conv3x3_relu_bn(x, p['c2'])
    return conv3x3_relu_bn(x, p['c3'], out_dtype=jnp.float32)    # logits in f32


def crop_and_concat(up, down):
    # torch: c = (down.H - up.H)//2 ; F.pad(down, (-c,)*4); cat along channels.
    c = (down.shape[1] - up.shape[1]) // 2
    if c > 0:
        down = down[:, c:down.shape[1] - c, c:down.shape[2] - c, :]
    # TODO(synk): fuse the concat into the next conv's K reduction (two
    # accumulating matmuls into one VMEM accumulator) to avoid this HBM concat.
    return jnp.concatenate([up, down], axis=-1)


# ----------------------------------------------------------------------------
# Parameter init + one-time packing to matmul layout (outside jit)
# ----------------------------------------------------------------------------
class _KeyGen:
    def __init__(self, key):
        self.key = key

    def next(self):
        self.key, sub = jax.random.split(self.key)
        return sub


def _init_conv(key, cin, cout, transpose=False):
    k1, k2 = jax.random.split(key)
    if transpose:
        shape = (cin, cout, 3, 3)
        fan_in = cout * 9
    else:
        shape = (cout, cin, 3, 3)
        fan_in = cin * 9
    bound = 1.0 / np.sqrt(fan_in)
    w = jax.random.uniform(k1, shape, jnp.float32, -bound, bound)
    b = jax.random.uniform(k2, (cout,), jnp.float32, -bound, bound)
    return w, b


def _pack_conv_bn(w, b):
    # w: (Cout, Cin, 3, 3) -> padded (Kp, Cp) bf16, rows ordered (kh, kw, cin).
    cout, cin = w.shape[0], w.shape[1]
    k = 9 * cin
    kp, cp = _round_up(k, 128), _round_up(cout, 128)
    wmat = jnp.transpose(w, (2, 3, 1, 0)).reshape(k, cout)
    wmat = jnp.pad(wmat, ((0, kp - k), (0, cp - cout))).astype(jnp.bfloat16)
    return {'w': wmat,
            'b': b.reshape(1, cout).astype(jnp.float32),
            'g': jnp.ones((1, cout), jnp.float32),
            'bt': jnp.zeros((1, cout), jnp.float32)}


def _pack_convT(w, b):
    # w: (Cin, Cout, 3, 3) -> sub-pixel phase matrix (4*Cin, 4*Cout), padded bf16.
    # Row blocks: input taps (dy,dx); column blocks: output phases (ry,rx);
    # the contributing tap is w[:, :, ry+1-2*dy, rx+1-2*dx] when in range.
    cin, cout = w.shape[0], w.shape[1]
    blocks = []
    for dy in (0, 1):
        for dx in (0, 1):
            row = []
            for ry in (0, 1):
                for rx in (0, 1):
                    ky, kx = ry + 1 - 2 * dy, rx + 1 - 2 * dx
                    if 0 <= ky <= 2 and 0 <= kx <= 2:
                        row.append(w[:, :, ky, kx])
                    else:
                        row.append(jnp.zeros((cin, cout), w.dtype))
            blocks.append(jnp.concatenate(row, axis=1))
    wmat = jnp.concatenate(blocks, axis=0)                   # (4*Cin, 4*Cout)
    k, c4 = 4 * cin, 4 * cout
    kp, cp = _round_up(k, 128), _round_up(c4, 128)
    wmat = jnp.pad(wmat, ((0, kp - k), (0, cp - c4))).astype(jnp.bfloat16)
    bias = jnp.tile(b.reshape(1, cout), (1, 4)).astype(jnp.float32)
    return {'w': wmat, 'b': bias}


def _make_conv_bn(kg, cin, cout):
    w, b = _init_conv(kg.next(), cin, cout)
    return _pack_conv_bn(w, b)


def _make_encode(kg, cin, cout):
    return {'c1': _make_conv_bn(kg, cin, cout), 'c2': _make_conv_bn(kg, cout, cout)}


def _make_decode(kg, cin, mic, ouc):
    p = {'c1': _make_conv_bn(kg, cin, mic),
         'c2': _make_conv_bn(kg, mic, mic)}
    w, b = _init_conv(kg.next(), mic, ouc, transpose=True)
    p['ct'] = _pack_convT(w, b)
    return p


def _make_final(kg, cin, mic, ouc):
    return {'c1': _make_conv_bn(kg, cin, mic),
            'c2': _make_conv_bn(kg, mic, mic),
            'c3': _make_conv_bn(kg, mic, ouc)}


def init_unet_params(key, inc, classes):
    kg = _KeyGen(key)
    return {
        'encode_1': _make_encode(kg, inc, 32),
        'down_1': _make_encode(kg, 32, 32),
        'encode_2': _make_encode(kg, 32, 64),
        'down_2': _make_encode(kg, 64, 64),
        'encode_3': _make_encode(kg, 64, 128),
        'down_3': _make_encode(kg, 128, 128),
        'encode_4': _make_encode(kg, 128, 256),
        'down_4': _make_encode(kg, 256, 256),
        'bottleneck': _make_decode(kg, 256, 512, 256),
        'up_4': _make_decode(kg, 512, 256, 128),
        'up_3': _make_decode(kg, 256, 128, 64),
        'up_2': _make_decode(kg, 128, 64, 32),
        'final': _make_final(kg, 64, 32, classes),
    }


# ----------------------------------------------------------------------------
# Full forward (matches UNet_FCN.forward)
# ----------------------------------------------------------------------------
def unet_fcn_forward(params, x_nchw):
    x = jnp.transpose(x_nchw, (0, 2, 3, 1))                  # NCHW -> NHWC
    level_1 = conv_encode(x, params['encode_1'])
    downsample_1 = conv_downsample(level_1, params['down_1'])
    level_2 = conv_encode(downsample_1, params['encode_2'])
    downsample_2 = conv_downsample(level_2, params['down_2'])
    level_3 = conv_encode(downsample_2, params['encode_3'])
    downsample_3 = conv_downsample(level_3, params['down_3'])
    level_4 = conv_encode(downsample_3, params['encode_4'])
    downsample_4 = conv_downsample(level_4, params['down_4'])
    bottleneck1 = conv_decode(downsample_4, params['bottleneck'])
    concat_level_4 = crop_and_concat(bottleneck1, level_4)
    up_3 = conv_decode(concat_level_4, params['up_4'])
    concat_level_3 = crop_and_concat(up_3, level_3)
    up_2 = conv_decode(concat_level_3, params['up_3'])
    concat_level_2 = crop_and_concat(up_2, level_2)
    up_1 = conv_decode(concat_level_2, params['up_2'])
    concat_level_1 = crop_and_concat(up_1, level_1)
    output = final_block(concat_level_1, params['final'])
    return jnp.transpose(output, (0, 3, 1, 2))               # NHWC -> NCHW


# ----------------------------------------------------------------------------
# Pure-JAX references for single-layer numeric checks
# ----------------------------------------------------------------------------
def _ref_conv_relu_bn(x, w, b, stride):
    y = jax.lax.conv_general_dilated(
        x, jnp.transpose(w, (2, 3, 1, 0)), window_strides=(stride, stride),
        padding=((1, 1), (1, 1)), dimension_numbers=("NHWC", "HWIO", "NHWC"))
    y = jnp.maximum(y + b, 0.0)
    mean = jnp.mean(y, axis=(0, 1, 2))
    var = jnp.mean(jnp.square(y - mean), axis=(0, 1, 2))
    return (y - mean) * jax.lax.rsqrt(var + _EPS)


def _ref_convtranspose(x, w, b):
    # PyTorch ConvTranspose2d(k=3, stride=2, padding=1, output_padding=1).
    wr = jnp.transpose(w[:, :, ::-1, ::-1], (2, 3, 0, 1))     # (kh,kw,Cin,Cout)
    y = jax.lax.conv_general_dilated(
        x, wr, window_strides=(1, 1), padding=((1, 2), (1, 2)),
        lhs_dilation=(2, 2), dimension_numbers=("NHWC", "HWIO", "NHWC"))
    return y + b


def _norm_err(got, want):
    return float(jnp.max(jnp.abs(got - want) / (1.0 + jnp.abs(want))))


# ----------------------------------------------------------------------------
if __name__ == "__main__":
    INC, CLASSES = 4, 3
    N, H, W = 2, 16, 16

    key = jax.random.PRNGKey(0)
    k_x, k_p, k_t = jax.random.split(key, 3)

    # --- single-layer numeric checks vs lax.conv references -----------------
    kt1, kt2, kt3, kt4, kt5 = jax.random.split(k_t, 5)
    xt = jax.random.normal(kt1, (2, 8, 8, 8), jnp.float32)
    wt = jax.random.normal(kt2, (16, 8, 3, 3), jnp.float32) * 0.2
    bt = jax.random.normal(kt3, (16,), jnp.float32) * 0.1
    layer_c = _pack_conv_bn(wt, bt)
    for s in (1, 2):
        got = conv3x3_relu_bn(xt, layer_c, stride=s, out_dtype=jnp.float32)
        want = _ref_conv_relu_bn(xt, wt, bt, s)
        err = _norm_err(got, want)
        assert err < 0.1, f"conv3x3 stride={s} mismatch: {err}"
    wtt = jax.random.normal(kt4, (8, 4, 3, 3), jnp.float32) * 0.2
    btt = jax.random.normal(kt5, (4,), jnp.float32) * 0.1
    layer_t = _pack_convT(wtt, btt)
    got = convtranspose3x3_s2(xt, layer_t).astype(jnp.float32)
    want = _ref_convtranspose(xt, wtt, btt)
    err = _norm_err(got, want)
    assert err < 0.1, f"convtranspose mismatch: {err}"

    # --- full UNet_FCN forward ----------------------------------------------
    x = jax.random.normal(k_x, (N, INC, H, W), dtype=jnp.float32)   # NCHW input
    params = init_unet_params(k_p, INC, CLASSES)

    fwd = jax.jit(unet_fcn_forward)
    out = jax.block_until_ready(fwd(params, x))

    assert out.shape == (N, CLASSES, H, W), out.shape
    assert bool(jnp.all(jnp.isfinite(out)))
    print("KERNEL_OK")
</pallas_src>

<mosaic_0001>
module attributes {stable_mosaic.version = 11 : i64} {
  func.func @_conv_relu_stats_k1_kernel(%arg0: i32, %arg1: memref<64x128xbf16, #tpu.memory_space<vmem>>, %arg2: memref<128x128xbf16, #tpu.memory_space<vmem>>, %arg3: memref<1x128xf32, #tpu.memory_space<vmem>>, %arg4: memref<64x128xbf16, #tpu.memory_space<vmem>>, %arg5: memref<8x128xf32, #tpu.memory_space<vmem>>, %arg6: memref<8x128xf32, #tpu.memory_space<vmem>>) attributes {dimension_semantics = [#tpu.dimension_semantics<parallel>], iteration_bounds = array<i64: 2>, scalar_prefetch = 0 : i64, scratch_operands = 0 : i64, tpu.core_type = #tpu.core_type<tc>, window_params = [{transform_indices = @transform_0, window_bounds = array<i64: 64, 128>}, {pipeline_mode = #tpu.pipeline_mode<synchronous>, transform_indices = @transform_1, window_bounds = array<i64: 128, 128>}, {pipeline_mode = #tpu.pipeline_mode<synchronous>, transform_indices = @transform_2, window_bounds = array<i64: 1, 128>}, {transform_indices = @transform_3, window_bounds = array<i64: 64, 128>}, {transform_indices = @transform_4, window_bounds = array<i64: 8, 128>}, {transform_indices = @transform_5, window_bounds = array<i64: 8, 128>}]} {
    %c0 = arith.constant 0 : index
    %c0_0 = arith.constant 0 : index
    %0 = vector.load %arg1[%c0, %c0_0] : memref<64x128xbf16, #tpu.memory_space<vmem>>, vector<64x128xbf16>
    %c0_1 = arith.constant 0 : index
    %c0_2 = arith.constant 0 : index
    %1 = vector.load %arg2[%c0_1, %c0_2] : memref<128x128xbf16, #tpu.memory_space<vmem>>, vector<128x128xbf16>
    %cst = arith.constant dense<0.000000e+00> : vector<64x128xf32>
    %2 = tpu.matmul %0, %1, %cst {dimension_numbers = #tpu.dot_dimension_numbers<[1], [0], [0], [1], [0, 0, 1, 1], [], []>} : vector<64x128xbf16>, vector<128x128xbf16>, vector<64x128xf32> -> vector<64x128xf32>
    %c0_3 = arith.constant 0 : index
    %c0_4 = arith.constant 0 : index
    %3 = vector.load %arg3[%c0_3, %c0_4] : memref<1x128xf32, #tpu.memory_space<vmem>>, vector<1x128xf32>
    %4 = vector.broadcast %3 : vector<1x128xf32> to vector<64x128xf32>
    %5 = arith.addf %2, %4 : vector<64x128xf32>
    %cst_5 = arith.constant 0.000000e+00 : f32
    %6 = vector.broadcast %cst_5 : f32 to vector<64x128xf32>
    %7 = arith.maximumf %5, %6 : vector<64x128xf32>
    %8 = arith.truncf %7 : vector<64x128xf32> to vector<64x128xbf16>
    %c0_6 = arith.constant 0 : index
    %c0_7 = arith.constant 0 : index
    %9 = vector.load %arg4[%c0_6, %c0_7] : memref<64x128xbf16, #tpu.memory_space<vmem>>, vector<64x128xbf16>
    tpu.vector_store %arg4[%c0_6, %c0_7], %8 {strides = array<i32>} : memref<64x128xbf16, #tpu.memory_space<vmem>>, vector<64x128xbf16>,
    %10 = tpu.iota {dimensions = array<i32: 0>} : vector<64x1xi32>
    %c64_i32 = arith.constant 64 : i32
    %11 = arith.muli %arg0, %c64_i32 : i32
    %12 = vector.broadcast %11 : i32 to vector<64x1xi32>
    %13 = arith.addi %10, %12 : vector<64x1xi32>
    %c128_i32 = arith.constant 128 : i32
    %14 = vector.broadcast %c128_i32 : i32 to vector<64x1xi32>
    %15 = arith.cmpi slt, %13, %14 : vector<64x1xi32>
    %cst_8 = arith.constant 0.000000e+00 : f32
    %16 = vector.shape_cast %15 : vector<64x1xi1> to vector<64x1xi1>
    %17 = vector.broadcast %16 : vector<64x1xi1> to vector<64x128xi1>
    %18 = vector.broadcast %cst_8 : f32 to vector<64x128xf32>
    %19 = arith.select %17, %7, %18 : vector<64x128xi1>, vector<64x128xf32>
    %cst_9 = arith.constant dense<0.000000e+00> : vector<128xf32>
    %20 = vector.multi_reduction <add>, %19, %cst_9 [0] : vector<64x128xf32> to vector<128xf32>
    %21 = vector.shape_cast %20 : vector<128xf32> to vector<1x128xf32>
    %22 = vector.shape_cast %21 : vector<1x128xf32> to vector<1x128xf32>
    %23 = vector.broadcast %22 : vector<1x128xf32> to vector<8x128xf32>
    %c0_10 = arith.constant 0 : index
    %c0_11 = arith.constant 0 : index
    %24 = vector.load %arg5[%c0_10, %c0_11] : memref<8x128xf32, #tpu.memory_space<vmem>>, vector<8x128xf32>
    tpu.vector_store %arg5[%c0_10, %c0_11], %23 {strides = array<i32>} : memref<8x128xf32, #tpu.memory_space<vmem>>, vector<8x128xf32>,
    %25 = arith.mulf %19, %19 : vector<64x128xf32>
    %cst_12 = arith.constant dense<0.000000e+00> : vector<128xf32>
    %26 = vector.multi_reduction <add>, %25, %cst_12 [0] : vector<64x128xf32> to vector<128xf32>
    %27 = vector.shape_cast %26 : vector<128xf32> to vector<1x128xf32>
    %28 = vector.shape_cast %27 : vector<1x128xf32> to vector<1x128xf32>
    %29 = vector.broadcast %28 : vector<1x128xf32> to vector<8x128xf32>
    %c0_13 = arith.constant 0 : index
    %c0_14 = arith.constant 0 : index
    %30 = vector.load %arg6[%c0_13, %c0_14] : memref<8x128xf32, #tpu.memory_space<vmem>>, vector<8x128xf32>
    tpu.vector_store %arg6[%c0_13, %c0_14], %29 {strides = array<i32>} : memref<8x128xf32, #tpu.memory_space<vmem>>, vector<8x128xf32>,
    return
  }
  func.func @transform_0(%arg0: i32) -> (i32, i32) {
    %c0_i32 = arith.constant 0 : i32
    %c0_i32_0 = arith.constant 0 : i32
    return %arg0, %c0_i32 : i32, i32
  }
  func.func @transform_1(%arg0: i32) -> (i32, i32) {
    %c0_i32 = arith.constant 0 : i32
    %c0_i32_0 = arith.constant 0 : i32
    %c0_i32_1 = arith.constant 0 : i32
    return %c0_i32, %c0_i32_0 : i32, i32
  }
  func.func @transform_2(%arg0: i32) -> (i32, i32) {
    %c0_i32 = arith.constant 0 : i32
    %c0_i32_0 = arith.constant 0 : i32
    %c0_i32_1 = arith.constant 0 : i32
    return %c0_i32, %c0_i32_0 : i32, i32
  }
  func.func @transform_3(%arg0: i32) -> (i32, i32) {
    %c0_i32 = arith.constant 0 : i32
    %c0_i32_0 = arith.constant 0 : i32
    return %arg0, %c0_i32 : i32, i32
  }
  func.func @transform_4(%arg0: i32) -> (i32, i32) {
    %c0_i32 = arith.constant 0 : i32
    %c0_i32_0 = arith.constant 0 : i32
    return %arg0, %c0_i32 : i32, i32
  }
  func.func @transform_5(%arg0: i32) -> (i32, i32) {
    %c0_i32 = arith.constant 0 : i32
    %c0_i32_0 = arith.constant 0 : i32
    return %arg0, %c0_i32 : i32, i32
  }
}

</mosaic_0001>

<llo_original>
// kernel: tpu_custom_call.1
$region0: #{tpu_custom_call.1}
  #allocation0 [shape = 'u32[]', space=smem, size = 0x4, offset = 0x4, fixed_abs, tag = 'smem constant byte address 0x4 - core index']
  #allocation1 [shape = 'u32[144,128]{1,0:T(1,128)}', space=vmem, size = 0x12000, scoped, tag = 'internal scratch']
  %s0 = inlined_call_operand.hbm [shape: bf16[128,128], index: 0, kind: input, shape index: {}]
  %s1 = inlined_call_operand.hbm [shape: bf16[128,128], index: 1, kind: input, shape index: {}]
  %s2 = inlined_call_operand.vmem [shape: f32[1,128], index: 2, kind: input, shape index: {}]
  %s3 = inlined_call_operand.hbm [shape: bf16[128,128], index: 3, kind: output, shape index: {0}]
  %s4 = inlined_call_operand.hbm [shape: f32[16,128], index: 4, kind: output, shape index: {1}]
  %s5 = inlined_call_operand.hbm [shape: f32[16,128], index: 5, kind: output, shape index: {2}]
  %6 = xla_tuple %s3, %s4, %s5
  %s7 = sld [smem:[#allocation0]]
  $region69: #{tpu_custom_call.1} parent=0
    _
  %s9 = ssub.s32 1, %s7
  %s10 = scalar_select 0, %s9, %s7
  $region1: #{tpu_custom_call.1} parent=0
    #allocation2 [shape = 'u8[32768]{0}', space=vmem, size = 0x8000, scoped, tag = 'input window, operand 0']
    #allocation3 [shape = 's32[2]{0}', space=sflag, size = 0x8, scoped, tag = 'scoped memory for tpu_custom_call.1']
    #allocation4 [shape = 's32[2]{0}', space=sflag, size = 0x8, scoped, tag = 'scoped memory for tpu_custom_call.1']
    #allocation5 [shape = 'u8[32768]{0}', space=vmem, size = 0x8000, scoped, tag = 'input window, operand 1, single buffered']
    #allocation6 [shape = 's32[1]{0}', space=sflag, size = 0x4, scoped, tag = 'scoped memory for tpu_custom_call.1']
    #allocation7 [shape = 'u8[32768]{0}', space=vmem, size = 0x8000, scoped, tag = 'output window, operand 0']
    #allocation8 [shape = 'u8[8192]{0}', space=vmem, size = 0x2000, scoped, tag = 'output window, operand 1']
    #allocation9 [shape = 's32[2]{0}', space=sflag, size = 0x8, scoped, tag = 'scoped memory for tpu_custom_call.1']
    #allocation10 [shape = 'u8[8192]{0}', space=vmem, size = 0x2000, scoped, tag = 'output window, operand 2']
    %11 = vsyncpa [#allocation3], 0
    %s12 = scalar_lea.sflag [#allocation3], 1
    %13 = vsyncpa %s12, 0
    %14 = vsyncpa [#allocation6], 0
    %15 = vsyncpa [#allocation4], 0
    %s16 = scalar_lea.sflag [#allocation4], 1
    %17 = vsyncpa %s16, 0
    %18 = vsyncpa [#allocation9], 0
    %s19 = scalar_lea.sflag [#allocation9], 1
    %20 = vsyncpa %s19, 0
    loop: start=0, step=1, limit=4
    $region2: #{tpu_custom_call.1} parent=1 // loop_pre_header
      _
    $region3: #{tpu_custom_call.1} parent=1 // loop_header
      %s22 = sphi 0, %s26
      %p23 = scmp.ge.s32.totalorder %s22, 4
      %s32 = sphi 0, %s34
      %s35 = sphi 0, %s32
      %s36 = sphi 0, %s35
      %s52 = sphi 0, %s36
      %s56 = sphi 0, %s56
      %s58 = sphi 0, %s56
      %s59 = sphi 0, %s58
      %s73 = sphi 0, %s59
      %s77 = sphi 0, %s77
      %s79 = sphi 0, %s77
      %s80 = sphi 0, %s79
      %s94 = sphi 0, %s80
      %s100 = sphi 0, %s102
      %s103 = sphi 0, %s100
      %s104 = sphi 0, %s103
      %s120 = sphi 0, %s104
      %s126 = sphi 0, %s128
      %s129 = sphi 0, %s126
      %s130 = sphi 0, %s129
      %s146 = sphi 0, %s130
      %s152 = sphi 0, %s154
      %s155 = sphi 0, %s152
      %s156 = sphi 0, %s155
      %s172 = sphi 0, %s156
    $region4: #{tpu_custom_call.1} parent=1 // loop_header_branch
      %25 = sbr.rel (%p23) target = $region8
    $region5: #{tpu_custom_call.1} parent=1 // loop_body
      %s27 = ssub.s32 %s22, 1
      %s28 = ssub.s32 %s22, 2
      %s29 = sadd.s32 %s22, 1
      %s30 = ssub.s32 %s22, %s29
      %p31 = scmp.eq.s32.totalorder %s30, 0
      %s33 = sadd.s32 %s32, 1
      %s34 = scalar_select %p31, %s32, %s33
      %p37 = pneg %p31
      %p38 = scmp.eq.s32.totalorder %s22, 1
      %p39 = por %p37, %p38
      %p40 = scmp.ne.s32.totalorder %s32, %s35
      %p41 = scmp.eq.s32.totalorder %s22, 0
      %p42 = por %p40, %p41
      %p43 = scmp.ne.s32.totalorder %s32, %s35
      %p44 = scmp.eq.s32.totalorder %s27, 1
      %p45 = por %p43, %p44
      %p46 = scmp.ne.s32.totalorder %s35, %s36
      %p47 = scmp.eq.s32.totalorder %s27, 0
      %p48 = por %p46, %p47
      %p49 = scmp.ne.s32.totalorder %s35, %s36
      %p50 = scmp.eq.s32.totalorder %s28, 1
      %p51 = por %p49, %p50
      %p53 = scmp.ne.s32.totalorder %s36, %s52
      %p54 = scmp.eq.s32.totalorder %s28, 0
      %p55 = por %p53, %p54
      %s57 = sadd.s32 %s56, 1
      %p60 = scmp.eq.s32.totalorder %s22, 1
      %p61 = scmp.ne.s32.totalorder %s56, %s58
      %p62 = scmp.eq.s32.totalorder %s22, 0
      %p63 = por %p61, %p62
      %p64 = scmp.ne.s32.totalorder %s56, %s58
      %p65 = scmp.eq.s32.totalorder %s27, 1
      %p66 = por %p64, %p65
      %p67 = scmp.ne.s32.totalorder %s58, %s59
      %p68 = scmp.eq.s32.totalorder %s27, 0
      %p69 = por %p67, %p68
      %p70 = scmp.ne.s32.totalorder %s58, %s59
      %p71 = scmp.eq.s32.totalorder %s28, 1
      %p72 = por %p70, %p71
      %p74 = scmp.ne.s32.totalorder %s59, %s73
      %p75 = scmp.eq.s32.totalorder %s28, 0
      %p76 = por %p74, %p75
      %s78 = sadd.s32 %s77, 1
      %p81 = scmp.eq.s32.totalorder %s22, 1
      %p82 = scmp.ne.s32.totalorder %s77, %s79
      %p83 = scmp.eq.s32.totalorder %s22, 0
      %p84 = por %p82, %p83
      %p85 = scmp.ne.s32.totalorder %s77, %s79
      %p86 = scmp.eq.s32.totalorder %s27, 1
      %p87 = por %p85, %p86
      %p88 = scmp.ne.s32.totalorder %s79, %s80
      %p89 = scmp.eq.s32.totalorder %s27, 0
      %p90 = por %p88, %p89
      %p91 = scmp.ne.s32.totalorder %s79, %s80
      %p92 = scmp.eq.s32.totalorder %s28, 1
      %p93 = por %p91, %p92
      %p95 = scmp.ne.s32.totalorder %s80, %s94
      %p96 = scmp.eq.s32.totalorder %s28, 0
      %p97 = por %p95, %p96
      %s98 = ssub.s32 %s22, %s29
      %p99 = scmp.eq.s32.totalorder %s98, 0
      %s101 = sadd.s32 %s100, 1
      %s102 = scalar_select %p99, %s100, %s101
      %p105 = pneg %p99
      %p106 = scmp.eq.s32.totalorder %s22, 1
      %p107 = por %p105, %p106
      %p108 = scmp.ne.s32.totalorder %s100, %s103
      %p109 = scmp.eq.s32.totalorder %s22, 0
      %p110 = por %p108, %p109
      %p111 = scmp.ne.s32.totalorder %s100, %s103
      %p112 = scmp.eq.s32.totalorder %s27, 1
      %p113 = por %p111, %p112
      %p114 = scmp.ne.s32.totalorder %s103, %s104
      %p115 = scmp.eq.s32.totalorder %s27, 0
      %p116 = por %p114, %p115
      %p117 = scmp.ne.s32.totalorder %s103, %s104
      %p118 = scmp.eq.s32.totalorder %s28, 1
      %p119 = por %p117, %p118
      %p121 = scmp.ne.s32.totalorder %s104, %s120
      %p122 = scmp.eq.s32.totalorder %s28, 0
      %p123 = por %p121, %p122
      %s124 = ssub.s32 %s22, %s29
      %p125 = scmp.eq.s32.totalorder %s124, 0
      %s127 = sadd.s32 %s126, 1
      %s128 = scalar_select %p125, %s126, %s127
      %p131 = pneg %p125
      %p132 = scmp.eq.s32.totalorder %s22, 1
      %p133 = por %p131, %p132
      %p134 = scmp.ne.s32.totalorder %s126, %s129
      %p135 = scmp.eq.s32.totalorder %s22, 0
      %p136 = por %p134, %p135
      %p137 = scmp.ne.s32.totalorder %s126, %s129
      %p138 = scmp.eq.s32.totalorder %s27, 1
      %p139 = por %p137, %p138
      %p140 = scmp.ne.s32.totalorder %s129, %s130
      %p141 = scmp.eq.s32.totalorder %s27, 0
      %p142 = por %p140, %p141
      %p143 = scmp.ne.s32.totalorder %s129, %s130
      %p144 = scmp.eq.s32.totalorder %s28, 1
      %p145 = por %p143, %p144
      %p147 = scmp.ne.s32.totalorder %s130, %s146
      %p148 = scmp.eq.s32.totalorder %s28, 0
      %p149 = por %p147, %p148
      %s150 = ssub.s32 %s22, %s29
      %p151 = scmp.eq.s32.totalorder %s150, 0
      %s153 = sadd.s32 %s152, 1
      %s154 = scalar_select %p151, %s152, %s153
      %p157 = pneg %p151
      %p158 = scmp.eq.s32.totalorder %s22, 1
      %p159 = por %p157, %p158
      %p160 = scmp.ne.s32.totalorder %s152, %s155
      %p161 = scmp.eq.s32.totalorder %s22, 0
      %p162 = por %p160, %p161
      %p163 = scmp.ne.s32.totalorder %s152, %s155
      %p164 = scmp.eq.s32.totalorder %s27, 1
      %p165 = por %p163, %p164
      %p166 = scmp.ne.s32.totalorder %s155, %s156
      %p167 = scmp.eq.s32.totalorder %s27, 0
      %p168 = por %p166, %p167
      %p169 = scmp.ne.s32.totalorder %s155, %s156
      %p170 = scmp.eq.s32.totalorder %s28, 1
      %p171 = por %p169, %p170
      %p173 = scmp.ne.s32.totalorder %s156, %s172
      %p174 = scmp.eq.s32.totalorder %s28, 0
      %p175 = por %p173, %p174
      %p176 = scmp.le.s32.totalorder 1, %s22
      %p177 = scmp.lt.s32.totalorder %s22, 3
      %p178 = pnand %p176, %p177
      %p179 = pneg %p178
      // Predicated region
      $region9: #{tpu_custom_call.1} parent=5 // pred_check
        _
      $region10: #{tpu_custom_call.1} parent=5 // pred_check_branch
        %181 = sbr.rel (%p178) target = $region12
      $region11: #{tpu_custom_call.1} parent=5 // pred_region
        %s182 = ssub.s32 %s22, 1
        // Predicated region
        $region13: #{tpu_custom_call.1} parent=11 // pred_check
          %p183 = pneg %p69
        $region14: #{tpu_custom_call.1} parent=11 // pred_check_branch
          %185 = sbr.rel (%p183) target = $region16
        $region15: #{tpu_custom_call.1} parent=11 // pred_region
          %s187 = ssub.s32 1024, 1024
          %188 = vsyncadd [#allocation6], %s187
          %s189 = sshll.u32 [#allocation5], 4
          %s190 = int_to_ptr.vmem [resolvable:$true] %s189
          %195 = dma.hbm_to_vmem [thread:$0]  %s1, 1024, %s190, [#allocation6], 64, 64, 4
        $region16: #{tpu_custom_call.1} parent=11 // pred_fallthru
          _
        // Predicated region
        $region17: #{tpu_custom_call.1} parent=11 // pred_check
          %p196 = pneg %p90
        $region18: #{tpu_custom_call.1} parent=11 // pred_check_branch
          %198 = sbr.rel (%p196) target = $region20
        $region19: #{tpu_custom_call.1} parent=11 // pred_region
          _
        $region20: #{tpu_custom_call.1} parent=11 // pred_fallthru
          _
      $region12: #{tpu_custom_call.1} parent=5 // pred_fallthru
        _
      %p199 = scmp.lt.s32.totalorder %s22, 2
      // Predicated region
      $region21: #{tpu_custom_call.1} parent=5 // pred_check
        %p200 = pneg %p199
      $region22: #{tpu_custom_call.1} parent=5 // pred_check_branch
        %202 = sbr.rel (%p200) target = $region24
      $region23: #{tpu_custom_call.1} parent=5 // pred_region
        // Predicated region
        $region25: #{tpu_custom_call.1} parent=23 // pred_check
          %p203 = pneg %p42
        $region26: #{tpu_custom_call.1} parent=23 // pred_check_branch
          %205 = sbr.rel (%p203) target = $region28
        $region27: #{tpu_custom_call.1} parent=23 // pred_region
          %s206 = sand.u32 %s32, 1
          %s207 = scalar_lea.sflag [#allocation3], %s206
          %s208 = sand.u32 %s32, 1
          %s209 = smul.addr %s208, 32
          %s210 = scalar_lea.vmem [#allocation2], %s209
          %s211 = smul.u32 8, %s22
          %s213 = ssub.s32 512, 512
          %214 = vsyncadd %s207, %s213
          %s215 = smul.addr %s211, 64
          %s216 = scalar_lea.hbm %s0, %s215
          %s217 = sshll.u32 %s210, 4
          %s218 = int_to_ptr.vmem [resolvable:$true] %s217
          %223 = dma.hbm_to_vmem [thread:$0]  %s216, 512, %s218, %s207, 64, 64, 4
        $region28: #{tpu_custom_call.1} parent=23 // pred_fallthru
          _
      $region24: #{tpu_custom_call.1} parent=5 // pred_fallthru
        _
      %p224 = scmp.le.s32.totalorder 1, %s22
      %p225 = scmp.lt.s32.totalorder %s22, 3
      %p226 = pnand %p224, %p225
      %p227 = pneg %p226
      // Predicated region
      $region29: #{tpu_custom_call.1} parent=5 // pred_check
        _
      $region30: #{tpu_custom_call.1} parent=5 // pred_check_branch
        %229 = sbr.rel (%p226) target = $region32
      $region31: #{tpu_custom_call.1} parent=5 // pred_region
        %s230 = ssub.s32 %s22, 1
        %s231 = sand.u32 %s35, 1
        %s232 = scalar_lea.sflag [#allocation3], %s231
        %s233 = sand.u32 %s35, 1
        %s234 = smul.addr %s233, 32
        %s235 = scalar_lea.vmem [#allocation2], %s234
        // Predicated region
        $region33: #{tpu_custom_call.1} parent=31 // pred_check
          %p236 = pneg %p48
        $region34: #{tpu_custom_call.1} parent=31 // pred_check_branch
          %238 = sbr.rel (%p236) target = $region36
        $region35: #{tpu_custom_call.1} parent=31 // pred_region
          %239 = dma.done %s232, 512
        $region36: #{tpu_custom_call.1} parent=31 // pred_fallthru
          _
        // Predicated region
        $region37: #{tpu_custom_call.1} parent=31 // pred_check
          %p240 = pneg %p69
        $region38: #{tpu_custom_call.1} parent=31 // pred_check_branch
          %242 = sbr.rel (%p240) target = $region40
        $region39: #{tpu_custom_call.1} parent=31 // pred_region
          %243 = dma.done [#allocation6], 1024
        $region40: #{tpu_custom_call.1} parent=31 // pred_fallthru
          _
        %s244 = sand.u32 %s35, 1
        %s245 = scalar_lea.sflag [#allocation3], %s244
        %s246 = sand.u32 %s35, 1
        %s247 = smul.addr %s246, 32
        %s248 = scalar_lea.vmem [#allocation2], %s247
        %p249 = pneg %p48
        %p250 = pneg %p45
        %p251 = pneg %p69
        %p252 = pneg %p66
        %p253 = pneg %p90
        %p254 = pneg %p87
        %p255 = pneg %p116
        %p256 = pneg %p113
        %s257 = sand.u32 %s103, 1
        %s258 = scalar_lea.sflag [#allocation4], %s257
        %s259 = sand.u32 %s103, 1
        %s260 = smul.addr %s259, 32
        %s261 = scalar_lea.vmem [#allocation7], %s260
        %p262 = pneg %p142
        %p263 = pneg %p139
        %s264 = sand.u32 %s27, 1
        %s265 = scalar_lea.sflag [#allocation9], %s264
        %s266 = sand.u32 %s129, 1
        %s267 = smul.addr %s266, 8
        %s268 = scalar_lea.vmem [#allocation8], %s267
        %p269 = pneg %p168
        %p270 = pneg %p165
        %s271 = sand.u32 %s27, 1
        %s272 = scalar_lea.sflag [#allocation9], %s271
        %s273 = sand.u32 %s155, 1
        %s274 = smul.addr %s273, 8
        %s275 = scalar_lea.vmem [#allocation10], %s274
        %s276 = smul.u32 8, %s27
        %s277 = smul.u32 8, %s27
        %v279 = vld [vmem:[%s235] sm:$0xf]
        %v280 = vld [vmem:[%s235 + $0x4] sm:$0xf]
        %v281 = vld [vmem:[%s235 + $0x8] sm:$0xf]
        %v282 = vld [vmem:[%s235 + $0xc] sm:$0xf]
        %v283 = vld [vmem:[%s235 + $0x10] sm:$0xf]
        %v284 = vld [vmem:[%s235 + $0x14] sm:$0xf]
        %v285 = vld [vmem:[%s235 + $0x18] sm:$0xf]
        %v286 = vld [vmem:[%s235 + $0x1c] sm:$0xf]
        %v287 = vld [vmem:[#allocation5] sm:$0xf]
        %v288 = vld [vmem:[#allocation5 + $0x4] sm:$0xf]
        %v289 = vld [vmem:[#allocation5 + $0x8] sm:$0xf]
        %v290 = vld [vmem:[#allocation5 + $0xc] sm:$0xf]
        %v291 = vld [vmem:[#allocation5 + $0x10] sm:$0xf]
        %v292 = vld [vmem:[#allocation5 + $0x14] sm:$0xf]
        %v293 = vld [vmem:[#allocation5 + $0x18] sm:$0xf]
        %v294 = vld [vmem:[#allocation5 + $0x1c] sm:$0xf]
        %v295 = vld [vmem:[#allocation5 + $0x20] sm:$0xf]
        %v296 = vld [vmem:[#allocation5 + $0x24] sm:$0xf]
        %v297 = vld [vmem:[#allocation5 + $0x28] sm:$0xf]
        %v298 = vld [vmem:[#allocation5 + $0x2c] sm:$0xf]
        %v299 = vld [vmem:[#allocation5 + $0x30] sm:$0xf]
        %v300 = vld [vmem:[#allocation5 + $0x34] sm:$0xf]
        %v301 = vld [vmem:[#allocation5 + $0x38] sm:$0xf]
        %v302 = vld [vmem:[#allocation5 + $0x3c] sm:$0xf]
        %v303 = vld [vmem:[%s2] sm:$0x1]
        %v305 = vlaneseq
        %v306 = vshrl.u32 %v305, 7
        %v307 = vsub.s32 0, %v306
        %v308 = vrot.slane %v303, %v307
        %v318 = vunpack.c.l.b16 %v279
        %v319 = vunpack.c.l.b16 %v280
        %v320 = vunpack.c.l.b16 %v281
        %v321 = vunpack.c.l.b16 %v282
        %v322 = vunpack.c.l.b16 %v283
        %v323 = vunpack.c.l.b16 %v284
        %v324 = vunpack.c.l.b16 %v285
        %v325 = vunpack.c.l.b16 %v286
        %v326 = vpack.c.b16 %v319, %v318
        %v327 = vpack.c.b16 %v321, %v320
        %v328 = vpack.c.b16 %v323, %v322
        %v329 = vpack.c.b16 %v325, %v324
        %v350 = vunpack.c.l.b16 %v287
        %v351 = vunpack.c.l.b16 %v288
        %v352 = vunpack.c.l.b16 %v289
        %v353 = vunpack.c.l.b16 %v290
        %v354 = vunpack.c.l.b16 %v291
        %v355 = vunpack.c.l.b16 %v292
        %v356 = vunpack.c.l.b16 %v293
        %v357 = vunpack.c.l.b16 %v294
        %v358 = vunpack.c.l.b16 %v295
        %v359 = vunpack.c.l.b16 %v296
        %v360 = vunpack.c.l.b16 %v297
        %v361 = vunpack.c.l.b16 %v298
        %v362 = vunpack.c.l.b16 %v299
        %v363 = vunpack.c.l.b16 %v300
        %v364 = vunpack.c.l.b16 %v301
        %v365 = vunpack.c.l.b16 %v302
        %v366 = vpack.c.b16 %v351, %v350
        %v367 = vpack.c.b16 %v353, %v352
        %v368 = vpack.c.b16 %v355, %v354
        %v369 = vpack.c.b16 %v357, %v356
        %v370 = vpack.c.b16 %v359, %v358
        %v371 = vpack.c.b16 %v361, %v360
        %v372 = vpack.c.b16 %v363, %v362
        %v373 = vpack.c.b16 %v365, %v364
        %382 = vmatprep.subr.bf16.mxu0 0
        %383 = vmatpush1.bf16.msra.mxu0 %v373
        %384 = vmatprep.subr.bf16.mxu0 0
        %385 = vmatpush1.bf16.msra.mxu0 %v372
        %386 = vmatprep.subr.bf16.mxu0 0
        %387 = vmatpush1.bf16.msra.mxu0 %v371
        %388 = vmatprep.subr.bf16.mxu0 0
        %389 = vmatpush1.bf16.msra.mxu0 %v370
        %390 = vmatprep.subr.bf16.mxu0 0
        %391 = vmatpush1.bf16.msra.mxu0 %v369
        %392 = vmatprep.subr.bf16.mxu0 0
        %393 = vmatpush1.bf16.msra.mxu0 %v368
        %394 = vmatprep.subr.bf16.mxu0 0
        %395 = vmatpush1.bf16.msra.mxu0 %v367
        %396 = vmatprep.subr.bf16.mxu0 0
        %397 = vmatpush1.bf16.msra.mxu0 %v366
        %398 = vmatprep.subr.bf16.mxu0 0
        %399 = vmatpush2.bf16.msra.mxu0 0
        %400 = vmatprep.subr.bf16.mxu0 0
        %401 = vmatpush2.bf16.msra.mxu0 0
        %402 = vmatprep.subr.bf16.mxu0 0
        %403 = vmatpush2.bf16.msra.mxu0 0
        %404 = vmatprep.subr.bf16.mxu0 0
        %405 = vmatpush2.bf16.msra.mxu0 0
        %406 = vmatprep.subr.bf16.mxu0 0
        %407 = vmatpush2.bf16.msra.mxu0 0
        %408 = vmatprep.subr.bf16.mxu0 0
        %409 = vmatpush2.bf16.msra.mxu0 0
        %410 = vmatprep.subr.bf16.mxu0 0
        %411 = vmatpush2.bf16.msra.mxu0 0
        %412 = vmatprep.subr.bf16.mxu0 0
        %413 = vmatpush2.bf16.msra.mxu0 0
        %414 = vmatprep.mubr.bf16.mxu0 0
        %415 = vmatmul.mubr.bf16.gmra.mxu0 %v326
        %v416 = vpop.f32.mrf.mxu0
        %v417 = vadd.f32 %v308, %v416
        %v418 = vpop.f32.mrf.mxu0
        %v419 = vpop.f32.mrf.mxu0
        %v420 = vadd.f32 %v308, %v419
        %v421 = vpop.f32.mrf.mxu0
        %422 = vmatprep.mubr.bf16.mxu0 0
        %423 = vmatmul.mubr.bf16.gmra.mxu0 %v327
        %v424 = vpop.f32.mrf.mxu0
        %v425 = vadd.f32 %v308, %v424
        %v426 = vpop.f32.mrf.mxu0
        %v427 = vpop.f32.mrf.mxu0
        %v428 = vadd.f32 %v308, %v427
        %v429 = vpop.f32.mrf.mxu0
        %430 = vmatprep.mubr.bf16.mxu0 0
        %431 = vmatmul.mubr.bf16.gmra.mxu0 %v328
        %v432 = vpop.f32.mrf.mxu0
        %v433 = vadd.f32 %v308, %v432
        %v434 = vpop.f32.mrf.mxu0
        %v435 = vpop.f32.mrf.mxu0
        %v436 = vadd.f32 %v308, %v435
        %v437 = vpop.f32.mrf.mxu0
        %438 = vmatprep.mubr.bf16.mxu0 0
        %439 = vmatmul.mubr.bf16.gmra.mxu0 %v329
        %v440 = vpop.f32.mrf.mxu0
        %v441 = vadd.f32 %v308, %v440
        %v442 = vpop.f32.mrf.mxu0
        %v443 = vpop.f32.mrf.mxu0
        %v444 = vadd.f32 %v308, %v443
        %v445 = vpop.f32.mrf.mxu0
        %446 = vdwg.mxu0
        %v447 = vmax.f32 %v417, 0.0
        %v448 = vmax.f32 %v420, 0.0
        %v449 = vmax.f32 %v425, 0.0
        %v450 = vmax.f32 %v428, 0.0
        %v451 = vmax.f32 %v433, 0.0
        %v452 = vmax.f32 %v436, 0.0
        %v453 = vmax.f32 %v441, 0.0
        %v454 = vmax.f32 %v444, 0.0
        %v455 = vpack.c.bf16 %v448, %v447
        %v456 = vpack.c.bf16 %v450, %v449
        %v457 = vpack.c.bf16 %v452, %v451
        %v458 = vpack.c.bf16 %v454, %v453
        %v463 = vunpack.c.l.b16 %v455
        %v464 = vunpack.c.h.b16 %v455
        %v465 = vunpack.c.l.b16 %v456
        %v466 = vunpack.c.h.b16 %v456
        %v467 = vunpack.c.l.b16 %v457
        %v468 = vunpack.c.h.b16 %v457
        %v469 = vunpack.c.l.b16 %v458
        %v470 = vunpack.c.h.b16 %v458
        %v471 = vpack.c.b16 %v463, %v463
        %v472 = vpack.c.b16 %v464, %v464
        %v473 = vpack.c.b16 %v465, %v465
        %v474 = vpack.c.b16 %v466, %v466
        %v475 = vpack.c.b16 %v467, %v467
        %v476 = vpack.c.b16 %v468, %v468
        %v477 = vpack.c.b16 %v469, %v469
        %v478 = vpack.c.b16 %v470, %v470
        %487 = vst [vmem:[%s261] sm:$0xf] %v471
        %488 = vst [vmem:[%s261 + $0x4] sm:$0xf] %v472
        %489 = vst [vmem:[%s261 + $0x8] sm:$0xf] %v473
        %490 = vst [vmem:[%s261 + $0xc] sm:$0xf] %v474
        %491 = vst [vmem:[%s261 + $0x10] sm:$0xf] %v475
        %492 = vst [vmem:[%s261 + $0x14] sm:$0xf] %v476
        %493 = vst [vmem:[%s261 + $0x18] sm:$0xf] %v477
        %494 = vst [vmem:[%s261 + $0x1c] sm:$0xf] %v478
        %v495 = vlaneseq
        %v496 = vshrl.u32 %v495, 7
        %v497 = vadd.s32 %v496, 8
        %v498 = vadd.s32 %v496, 16
        %v499 = vadd.s32 %v496, 24
        %v500 = vadd.s32 %v496, 32
        %v501 = vadd.s32 %v496, 40
        %v502 = vadd.s32 %v496, 48
        %v503 = vadd.s32 %v496, 56
        %s504 = smul.u32 %s27, 64
        %v505 = vstv %s504
        %v506 = vadd.s32 %v496, %v505
        %v507 = vadd.s32 %v497, %v505
        %v508 = vadd.s32 %v498, %v505
        %v509 = vadd.s32 %v499, %v505
        %v510 = vadd.s32 %v500, %v505
        %v511 = vadd.s32 %v501, %v505
        %v512 = vadd.s32 %v502, %v505
        %v513 = vadd.s32 %v503, %v505
        %vm514 = vcmp.lt.s32.totalorder %v506, 128
        %vm515 = vcmp.lt.s32.totalorder %v507, 128
        %vm516 = vcmp.lt.s32.totalorder %v508, 128
        %vm517 = vcmp.lt.s32.totalorder %v509, 128
        %vm518 = vcmp.lt.s32.totalorder %v510, 128
        %vm519 = vcmp.lt.s32.totalorder %v511, 128
        %vm520 = vcmp.lt.s32.totalorder %v512, 128
        %vm521 = vcmp.lt.s32.totalorder %v513, 128
        %v522 = vsel %vm514, 1, 0
        %v523 = vsel %vm515, 1, 0
        %v524 = vsel %vm516, 1, 0
        %v525 = vsel %vm517, 1, 0
        %v526 = vsel %vm518, 1, 0
        %v527 = vsel %vm519, 1, 0
        %v528 = vsel %vm520, 1, 0
        %v529 = vsel %vm521, 1, 0
        %vm530 = vcmp.eq.s32.totalorder %v522, 1
        %vm531 = vcmp.eq.s32.totalorder %v523, 1
        %vm532 = vcmp.eq.s32.totalorder %v524, 1
        %vm533 = vcmp.eq.s32.totalorder %v525, 1
        %vm534 = vcmp.eq.s32.totalorder %v526, 1
        %vm535 = vcmp.eq.s32.totalorder %v527, 1
        %vm536 = vcmp.eq.s32.totalorder %v528, 1
        %vm537 = vcmp.eq.s32.totalorder %v529, 1
        %v538 = vsel %vm530, %v447, 0.0
        %v539 = vsel %vm531, %v448, 0.0
        %v540 = vsel %vm532, %v449, 0.0
        %v541 = vsel %vm533, %v450, 0.0
        %v542 = vsel %vm534, %v451, 0.0
        %v543 = vsel %vm535, %v452, 0.0
        %v544 = vsel %vm536, %v453, 0.0
        %v545 = vsel %vm537, %v454, 0.0
        %v546 = vadd.f32 %v538, %v539
        %v547 = vadd.f32 %v546, %v540
        %v548 = vadd.f32 %v547, %v541
        %v549 = vadd.f32 %v548, %v542
        %v550 = vadd.f32 %v549, %v543
        %v551 = vadd.f32 %v550, %v544
        %v552 = vadd.f32 %v551, %v545
        %v553 = vrot.slane %v552, 4
        %v554 = vadd.f32 %v552, %v553
        %v555 = vrot.slane %v554, 2
        %v556 = vadd.f32 %v554, %v555
        %v557 = vrot.slane %v556, 1
        %v558 = vadd.f32 %v556, %v557
        %559 = vst [vmem:[%s268] sm:$0xff] %v558
        %v560 = vmul.f32 %v538, %v538
        %v561 = vmul.f32 %v539, %v539
        %v562 = vmul.f32 %v540, %v540
        %v563 = vmul.f32 %v541, %v541
        %v564 = vmul.f32 %v542, %v542
        %v565 = vmul.f32 %v543, %v543
        %v566 = vmul.f32 %v544, %v544
        %v567 = vmul.f32 %v545, %v545
        %v568 = vadd.f32 %v560, %v561
        %v569 = vadd.f32 %v568, %v562
        %v570 = vadd.f32 %v569, %v563
        %v571 = vadd.f32 %v570, %v564
        %v572 = vadd.f32 %v571, %v565
        %v573 = vadd.f32 %v572, %v566
        %v574 = vadd.f32 %v573, %v567
        %v575 = vrot.slane %v574, 4
        %v576 = vadd.f32 %v574, %v575
        %v577 = vrot.slane %v576, 2
        %v578 = vadd.f32 %v576, %v577
        %v579 = vrot.slane %v578, 1
        %v580 = vadd.f32 %v578, %v579
        %581 = vst [vmem:[%s275] sm:$0xff] %v580
        %s582 = sand.u32 %s103, 1
        %s583 = scalar_lea.sflag [#allocation4], %s582
        %s584 = sand.u32 %s103, 1
        %s585 = smul.addr %s584, 32
        %s586 = scalar_lea.vmem [#allocation7], %s585
        %s587 = sand.u32 %s27, 1
        %s588 = scalar_lea.sflag [#allocation9], %s587
        %s589 = sand.u32 %s129, 1
        %s590 = smul.addr %s589, 8
        %s591 = scalar_lea.vmem [#allocation8], %s590
        %s592 = sand.u32 %s27, 1
        %s593 = scalar_lea.sflag [#allocation9], %s592
        %s594 = sand.u32 %s155, 1
        %s595 = smul.addr %s594, 8
        %s596 = scalar_lea.vmem [#allocation10], %s595
        // Predicated region
        $region41: #{tpu_custom_call.1} parent=31 // pred_check
          %p597 = pneg %p113
        $region42: #{tpu_custom_call.1} parent=31 // pred_check_branch
          %599 = sbr.rel (%p597) target = $region44
        $region43: #{tpu_custom_call.1} parent=31 // pred_region
          %s600 = smul.u32 8, %s27
          %s602 = ssub.s32 512, 512
          %603 = vsyncadd %s583, %s602
          %s604 = smul.addr %s600, 64
          %s605 = scalar_lea.hbm %s3, %s604
          %s606 = sshll.u32 %s586, 4
          %s607 = int_to_ptr.vmem [resolvable:$true] %s606
          %612 = dma.vmem_to_hbm [thread:$0]  %s607, 512, %s605, %s583, 64, 64, 4
        $region44: #{tpu_custom_call.1} parent=31 // pred_fallthru
          _
        // Predicated region
        $region45: #{tpu_custom_call.1} parent=31 // pred_check
          %p613 = pneg %p139
        $region46: #{tpu_custom_call.1} parent=31 // pred_check_branch
          %615 = sbr.rel (%p613) target = $region48
        $region47: #{tpu_custom_call.1} parent=31 // pred_region
          %s617 = ssub.s32 128, 128
          %618 = vsyncadd %s588, %s617
          %s619 = smul.addr %s27, 128
          %s620 = scalar_lea.hbm %s4, %s619
          %s622 = sshll.u32 %s591, 4
          %s623 = int_to_ptr.vmem [resolvable:$true] %s622
          %625 = dma.vmem_to_hbm [thread:$0]  %s623, 128, %s620, %s588
        $region48: #{tpu_custom_call.1} parent=31 // pred_fallthru
          _
        // Predicated region
        $region49: #{tpu_custom_call.1} parent=31 // pred_check
          %p626 = pneg %p165
        $region50: #{tpu_custom_call.1} parent=31 // pred_check_branch
          %628 = sbr.rel (%p626) target = $region52
        $region51: #{tpu_custom_call.1} parent=31 // pred_region
          %s630 = ssub.s32 128, 128
          %631 = vsyncadd %s593, %s630
          %s632 = smul.addr %s27, 128
          %s633 = scalar_lea.hbm %s5, %s632
          %s635 = sshll.u32 %s596, 4
          %s636 = int_to_ptr.vmem [resolvable:$true] %s635
          %638 = dma.vmem_to_hbm [thread:$0]  %s636, 128, %s633, %s593
        $region52: #{tpu_custom_call.1} parent=31 // pred_fallthru
          _
      $region32: #{tpu_custom_call.1} parent=5 // pred_fallthru
        _
      %p639 = scmp.le.s32.totalorder 2, %s22
      // Predicated region
      $region53: #{tpu_custom_call.1} parent=5 // pred_check
        %p640 = pneg %p639
      $region54: #{tpu_custom_call.1} parent=5 // pred_check_branch
        %642 = sbr.rel (%p640) target = $region56
      $region55: #{tpu_custom_call.1} parent=5 // pred_region
        %s643 = ssub.s32 %s22, 2
        // Predicated region
        $region57: #{tpu_custom_call.1} parent=55 // pred_check
          %p644 = pneg %p119
        $region58: #{tpu_custom_call.1} parent=55 // pred_check_branch
          %646 = sbr.rel (%p644) target = $region60
        $region59: #{tpu_custom_call.1} parent=55 // pred_region
          %s647 = sand.u32 %s104, 1
          %s648 = scalar_lea.sflag [#allocation4], %s647
          %s649 = sand.u32 %s104, 1
          %s650 = smul.addr %s649, 32
          %s651 = scalar_lea.vmem [#allocation7], %s650
          %652 = dma.done %s648, 512
        $region60: #{tpu_custom_call.1} parent=55 // pred_fallthru
          _
        // Predicated region
        $region61: #{tpu_custom_call.1} parent=55 // pred_check
          %p653 = pneg %p145
        $region62: #{tpu_custom_call.1} parent=55 // pred_check_branch
          %655 = sbr.rel (%p653) target = $region64
        $region63: #{tpu_custom_call.1} parent=55 // pred_region
          %s656 = sand.u32 %s28, 1
          %s657 = scalar_lea.sflag [#allocation9], %s656
          %s658 = sand.u32 %s130, 1
          %s659 = smul.addr %s658, 8
          %s660 = scalar_lea.vmem [#allocation8], %s659
          %661 = dma.done %s657, 128
        $region64: #{tpu_custom_call.1} parent=55 // pred_fallthru
          _
        // Predicated region
        $region65: #{tpu_custom_call.1} parent=55 // pred_check
          %p662 = pneg %p171
        $region66: #{tpu_custom_call.1} parent=55 // pred_check_branch
          %664 = sbr.rel (%p662) target = $region68
        $region67: #{tpu_custom_call.1} parent=55 // pred_region
          %s665 = sand.u32 %s28, 1
          %s666 = scalar_lea.sflag [#allocation9], %s665
          %s667 = sand.u32 %s156, 1
          %s668 = smul.addr %s667, 8
          %s669 = scalar_lea.vmem [#allocation10], %s668
          %670 = dma.done %s666, 128
        $region68: #{tpu_custom_call.1} parent=55 // pred_fallthru
          _
      $region56: #{tpu_custom_call.1} parent=5 // pred_fallthru
        _
    $region6: #{tpu_custom_call.1} parent=1 // loop_footer
      %s26 = sadd.s32 1, %s22
    $region7: #{tpu_custom_call.1} parent=1 // loop_footer_branch
      %21 = sbr.rel target = $region3
    $region8: #{tpu_custom_call.1} parent=1 // loop_exit
      _
    %671 = vsyncpa [#allocation3], 1
    %s672 = scalar_lea.sflag [#allocation3], 1
    %673 = vsyncpa %s672, 1
    %674 = vsyncpa [#allocation6], 1
    %675 = vsyncpa [#allocation4], 1
    %s676 = scalar_lea.sflag [#allocation4], 1
    %677 = vsyncpa %s676, 1
    %678 = vsyncpa [#allocation9], 1
    %s679 = scalar_lea.sflag [#allocation9], 1
    %680 = vsyncpa %s679, 1

</llo_original>
